<compile_context>
chip_gen: v7x
topology: tpu7x:2x2x1
jax: 0.10.0
libtpu: 0.0.40
codegen_flags: <defaults>
</compile_context>

<pallas_src>
import numpy as np
import jax
import jax.numpy as jnp
from jax.experimental import pallas as pl
from jax.experimental.pallas import tpu as pltpu

LANE = 128
SUBLANE = 8


def _make_augmix_kernel(even_scale, even_clamped, odd_scale, odd_clamped, has_odd):
    """All arguments are baked Python constants (see host-side folding)."""

    def kernel(*refs):
        if has_odd:
            perm_ref, img_ref, out_ref = refs
        else:
            img_ref, out_ref = refs

        x = img_ref[...]                         # (block_rows, W_pad) f32, lane-dense

        # Un-flipped side: one multiply covers (1-m)*x plus every even branch
        # whose clamp never binds; each remaining branch is one fused mul+min.
        acc = x * even_scale
        for K, c in even_clamped:
            acc = acc + jnp.minimum(x * K, c)

        if has_odd:
            odd = None
            if odd_scale != 0.0:
                odd = x * odd_scale
            for K, c in odd_clamped:
                t = jnp.minimum(x * K, c)
                odd = t if odd is None else odd + t
            # Single batched lane reversal for all flipped branches:
            # (rows, W) @ (W, W) 0/1 reverse permutation on the MXU.
            acc = acc + jnp.dot(odd, perm_ref[...],
                                preferred_element_type=jnp.float32)

        out_ref[...] = acc

    return kernel


def augmix_forward(img, *, severity=3, width=3, depth=-1, alpha=1.0, seed=0):
    """img: (N, C, H, W) float32, values assumed in [0, 1] (precondition).

    Returns (kernel_out, numpy_reference).
    """
    N, C, H, W = img.shape
    img = img.astype(jnp.float32)
    rng = np.random.RandomState(seed)

    # ---------------- host-side AugMix randomness (baked as constants) -------
    depth = depth if depth > 0 else int(rng.randint(1, 3))
    ws = np.float32(rng.dirichlet([alpha] * width))            # (width,)
    m = float(np.float32(rng.beta(alpha, alpha)))              # scalar

    # random.choice(self.augmentations) per (branch, step):
    #   0 -> RandomCrop(224, pad_if_needed)  (identity placeholder)
    #   1 -> RandomHorizontalFlip(p=0.5)
    #   2 -> ColorJitter (brightness component only)
    op_codes = rng.randint(0, 3, size=(width, depth)).astype(np.int32)
    flip_coin = rng.rand(width, depth) < 0.5
    bright = 1.0 + rng.uniform(-1.0, 1.0, size=(width, depth)) * 0.8 * severity
    bright = np.clip(bright, 0.1, None).astype(np.float32)
    # TODO(synk): full ColorJitter (contrast/saturation/hue) and RandomCrop(224,
    # pad_if_needed) with random offsets have no clean in-kernel equivalent here.

    # ---------------- fold each branch to one fused op -----------------------
    # For x in [0,1] and b_k > 0:
    #   clip(..clip(x*b1,0,1)..*bk,0,1) == min(x*P, C),
    #     P = prod(b_j),  C = min(1, b_k, b_k*b_{k-1}, ..., b_k*...*b_2)
    # so m*w_i*chain(x) == min(x*K, c) with K = m*w_i*P, c = m*w_i*C.
    # hflip commutes with all of it -> track a parity bit, flip once per group.
    even_scale = 1.0 - m                 # the (1-m)*x blend term
    odd_scale = 0.0
    even_clamped, odd_clamped = [], []
    for i in range(width):
        parity, P, Cc = 0, 1.0, 1.0
        for d in range(depth):
            code = int(op_codes[i, d])
            if code == 1 and bool(flip_coin[i, d]):
                parity ^= 1
            elif code == 2:
                b = float(bright[i, d])
                P *= b
                Cc = min(Cc * b, 1.0)
            # code == 0: identity placeholder (skipped at trace time)
        w_eff = m * float(ws[i])
        K, c = w_eff * P, w_eff * Cc
        if P <= Cc:                      # clamp never binds for x in [0,1]
            if parity == 0:
                even_scale += K
            else:
                odd_scale += K
        else:
            (even_clamped if parity == 0 else odd_clamped).append((K, c))
    has_odd = (odd_scale != 0.0) or bool(odd_clamped)

    # ---------------- lane-dense 2D layout + per-chip tiling -----------------
    W_pad = max(LANE, -(-W // LANE) * LANE)      # unmasked 128-wide stores
    total_rows = N * C * H

    try:
        vmem_cap = int(pltpu.get_tpu_info().vmem_capacity_bytes)
    except Exception:
        vmem_cap = 64 << 20                      # conservative (v7x-like)
    if vmem_cap >= (96 << 20):                   # v5e / v6e: 128 MiB VMEM
        target_block_bytes, vmem_cap_limit = 4 << 20, 64 << 20
    else:                                        # v7x: 64 MiB VMEM per TC
        target_block_bytes, vmem_cap_limit = 2 << 20, 36 << 20

    MIN_STEPS = 8                                # 2 TCs x >=4 blocks in flight
    bytes_per_row = W_pad * 4
    target_rows = max(SUBLANE,
                      (target_block_bytes // bytes_per_row) // SUBLANE * SUBLANE)
    steps_cap_rows = max(SUBLANE, (total_rows // MIN_STEPS) // SUBLANE * SUBLANE)
    block_rows = min(target_rows, steps_cap_rows)
    padded_rows = -(-total_rows // block_rows) * block_rows
    grid = (padded_rows // block_rows,)

    img2d = img.reshape(total_rows, W)
    if W_pad != W or padded_rows != total_rows:
        img2d = jnp.pad(img2d, ((0, padded_rows - total_rows), (0, W_pad - W)))

    in_specs, operands = [], []
    if has_odd:
        # Reverse permutation on the real W columns, identity on pad columns
        # so padded lanes never mix into real lanes.
        perm = np.zeros((W_pad, W_pad), np.float32)
        perm[np.arange(W), W - 1 - np.arange(W)] = 1.0
        if W_pad > W:
            perm[np.arange(W, W_pad), np.arange(W, W_pad)] = 1.0
        in_specs.append(pl.BlockSpec((W_pad, W_pad), lambda b: (0, 0)))
        operands.append(jnp.asarray(perm))
    in_specs.append(pl.BlockSpec((block_rows, W_pad), lambda b: (b, 0)))
    operands.append(img2d)

    block_bytes = block_rows * W_pad * 4
    # 2x double-buffered input + 2x output + ~4 live full-block temporaries
    # + perm double-buffer + slack.
    vmem_need = 8 * block_bytes + 2 * W_pad * W_pad * 4 + (2 << 20)
    vmem_limit = int(min(vmem_cap_limit, max(16 << 20, vmem_need)))

    kernel = _make_augmix_kernel(even_scale, even_clamped,
                                 odd_scale, odd_clamped, has_odd)
    out2d = pl.pallas_call(
        kernel,
        out_shape=jax.ShapeDtypeStruct((padded_rows, W_pad), jnp.float32),
        grid=grid,
        in_specs=in_specs,
        out_specs=pl.BlockSpec((block_rows, W_pad), lambda b: (b, 0)),
        compiler_params=pltpu.CompilerParams(
            dimension_semantics=("parallel",),
            vmem_limit_bytes=vmem_limit,
        ),
    )(*operands)
    out = out2d[:total_rows, :W].reshape(N, C, H, W)

    # ---------------- pure-numpy reference (ops in original order) -----------
    # Validates the pixel math, the chain->min collapse and the flip hoisting.
    x_np = np.asarray(img, dtype=np.float32)
    mix_np = np.zeros_like(x_np)
    for i in range(width):
        aug = x_np.copy()
        for d in range(depth):
            code = int(op_codes[i, d])
            if code == 1 and bool(flip_coin[i, d]):
                aug = aug[..., ::-1]
            elif code == 2:
                aug = np.clip(aug * bright[i, d], 0.0, 1.0).astype(np.float32)
        mix_np = mix_np + ws[i] * aug
    ref = (1.0 - m) * x_np + m * mix_np

    return out, ref


if __name__ == "__main__":
    key = jax.random.PRNGKey(0)
    N, C, H, W = 8, 3, 16, 128            # small NCHW test images in [0, 1]
    img = jax.random.uniform(key, (N, C, H, W), dtype=jnp.float32)

    out, ref = augmix_forward(img, severity=3, width=3, depth=-1, alpha=1.0, seed=0)
    out = jax.block_until_ready(out)

    np.testing.assert_allclose(np.asarray(out), ref, rtol=1e-5, atol=1e-5)
    print("KERNEL_OK")
</pallas_src>

<mosaic_0001>
module attributes {stable_mosaic.version = 11 : i64} {
  func.func @kernel(%arg0: i32, %arg1: memref<48x128xf32, #tpu.memory_space<vmem>>, %arg2: memref<48x128xf32, #tpu.memory_space<vmem>>) attributes {dimension_semantics = [#tpu.dimension_semantics<parallel>], iteration_bounds = array<i64: 8>, scalar_prefetch = 0 : i64, scratch_operands = 0 : i64, tpu.core_type = #tpu.core_type<tc>, window_params = [{transform_indices = @transform_0, window_bounds = array<i64: 48, 128>}, {transform_indices = @transform_1, window_bounds = array<i64: 48, 128>}]} {
    %c0 = arith.constant 0 : index
    %c0_0 = arith.constant 0 : index
    %0 = vector.load %arg1[%c0, %c0_0] : memref<48x128xf32, #tpu.memory_space<vmem>>, vector<48x128xf32>
    %cst = arith.constant 1.000000e+00 : f32
    %1 = vector.broadcast %cst : f32 to vector<48x128xf32>
    %2 = arith.mulf %0, %1 : vector<48x128xf32>
    %c0_1 = arith.constant 0 : index
    %c0_2 = arith.constant 0 : index
    %3 = vector.load %arg2[%c0_1, %c0_2] : memref<48x128xf32, #tpu.memory_space<vmem>>, vector<48x128xf32>
    tpu.vector_store %arg2[%c0_1, %c0_2], %2 {strides = array<i32>} : memref<48x128xf32, #tpu.memory_space<vmem>>, vector<48x128xf32>,
    return
  }
  func.func @transform_0(%arg0: i32) -> (i32, i32) {
    %c0_i32 = arith.constant 0 : i32
    %c0_i32_0 = arith.constant 0 : i32
    return %arg0, %c0_i32 : i32, i32
  }
  func.func @transform_1(%arg0: i32) -> (i32, i32) {
    %c0_i32 = arith.constant 0 : i32
    %c0_i32_0 = arith.constant 0 : i32
    return %arg0, %c0_i32 : i32, i32
  }
}

</mosaic_0001>

<llo_original>
// kernel: tpu_custom_call.1
$region0: #{tpu_custom_call.1}
  #allocation0 [shape = 'u32[]', space=smem, size = 0x4, offset = 0x4, fixed_abs, tag = 'smem constant byte address 0x4 - core index']
  #allocation1 [shape = 'u32[144,128]{1,0:T(1,128)}', space=vmem, size = 0x12000, scoped, tag = 'internal scratch']
  %s0 = inlined_call_operand.hbm [shape: f32[384,128], index: 0, kind: input, shape index: {}]
  %s1 = inlined_call_operand.hbm [shape: f32[384,128], index: 1, kind: output, shape index: {}]
  %s2 = sld [smem:[#allocation0]]
  $region41: #{tpu_custom_call.1} parent=0
    _
  %s4 = ssub.s32 1, %s2
  %s5 = scalar_select 0, %s4, %s2
  $region1: #{tpu_custom_call.1} parent=0
    #allocation2 [shape = 'u8[49152]{0}', space=vmem, size = 0xc000, scoped, tag = 'input window, operand 0']
    #allocation3 [shape = 's32[2]{0}', space=sflag, size = 0x8, scoped, tag = 'scoped memory for tpu_custom_call.1']
    #allocation4 [shape = 's32[2]{0}', space=sflag, size = 0x8, scoped, tag = 'scoped memory for tpu_custom_call.1']
    #allocation5 [shape = 'u8[49152]{0}', space=vmem, size = 0xc000, scoped, tag = 'output window, operand 0']
    %6 = vsyncpa [#allocation3], 0
    %s7 = scalar_lea.sflag [#allocation3], 1
    %8 = vsyncpa %s7, 0
    %9 = vsyncpa [#allocation4], 0
    %s10 = scalar_lea.sflag [#allocation4], 1
    %11 = vsyncpa %s10, 0
    loop: start=0, step=1, limit=10
    $region2: #{tpu_custom_call.1} parent=1 // loop_pre_header
      _
    $region3: #{tpu_custom_call.1} parent=1 // loop_header
      %s13 = sphi 0, %s17
      %p14 = scmp.ge.s32.totalorder %s13, 10
      %s23 = sphi 0, %s25
      %s26 = sphi 0, %s23
      %s27 = sphi 0, %s26
      %s43 = sphi 0, %s27
      %s49 = sphi 0, %s51
      %s52 = sphi 0, %s49
      %s53 = sphi 0, %s52
      %s69 = sphi 0, %s53
    $region4: #{tpu_custom_call.1} parent=1 // loop_header_branch
      %16 = sbr.rel (%p14) target = $region8
    $region5: #{tpu_custom_call.1} parent=1 // loop_body
      %s18 = ssub.s32 %s13, 1
      %s19 = ssub.s32 %s13, 2
      %s20 = sadd.s32 %s13, 1
      %s21 = ssub.s32 %s13, %s20
      %p22 = scmp.eq.s32.totalorder %s21, 0
      %s24 = sadd.s32 %s23, 1
      %s25 = scalar_select %p22, %s23, %s24
      %p28 = pneg %p22
      %p29 = scmp.eq.s32.totalorder %s13, 7
      %p30 = por %p28, %p29
      %p31 = scmp.ne.s32.totalorder %s23, %s26
      %p32 = scmp.eq.s32.totalorder %s13, 0
      %p33 = por %p31, %p32
      %p34 = scmp.ne.s32.totalorder %s23, %s26
      %p35 = scmp.eq.s32.totalorder %s18, 7
      %p36 = por %p34, %p35
      %p37 = scmp.ne.s32.totalorder %s26, %s27
      %p38 = scmp.eq.s32.totalorder %s18, 0
      %p39 = por %p37, %p38
      %p40 = scmp.ne.s32.totalorder %s26, %s27
      %p41 = scmp.eq.s32.totalorder %s19, 7
      %p42 = por %p40, %p41
      %p44 = scmp.ne.s32.totalorder %s27, %s43
      %p45 = scmp.eq.s32.totalorder %s19, 0
      %p46 = por %p44, %p45
      %s47 = ssub.s32 %s13, %s20
      %p48 = scmp.eq.s32.totalorder %s47, 0
      %s50 = sadd.s32 %s49, 1
      %s51 = scalar_select %p48, %s49, %s50
      %p54 = pneg %p48
      %p55 = scmp.eq.s32.totalorder %s13, 7
      %p56 = por %p54, %p55
      %p57 = scmp.ne.s32.totalorder %s49, %s52
      %p58 = scmp.eq.s32.totalorder %s13, 0
      %p59 = por %p57, %p58
      %p60 = scmp.ne.s32.totalorder %s49, %s52
      %p61 = scmp.eq.s32.totalorder %s18, 7
      %p62 = por %p60, %p61
      %p63 = scmp.ne.s32.totalorder %s52, %s53
      %p64 = scmp.eq.s32.totalorder %s18, 0
      %p65 = por %p63, %p64
      %p66 = scmp.ne.s32.totalorder %s52, %s53
      %p67 = scmp.eq.s32.totalorder %s19, 7
      %p68 = por %p66, %p67
      %p70 = scmp.ne.s32.totalorder %s53, %s69
      %p71 = scmp.eq.s32.totalorder %s19, 0
      %p72 = por %p70, %p71
      %p73 = scmp.le.s32.totalorder 1, %s13
      %p74 = scmp.lt.s32.totalorder %s13, 9
      %p75 = pnand %p73, %p74
      %p76 = pneg %p75
      // Predicated region
      $region9: #{tpu_custom_call.1} parent=5 // pred_check
        _
      $region10: #{tpu_custom_call.1} parent=5 // pred_check_branch
        %78 = sbr.rel (%p75) target = $region12
      $region11: #{tpu_custom_call.1} parent=5 // pred_region
        %s79 = ssub.s32 %s13, 1
      $region12: #{tpu_custom_call.1} parent=5 // pred_fallthru
        _
      %p80 = scmp.lt.s32.totalorder %s13, 8
      // Predicated region
      $region13: #{tpu_custom_call.1} parent=5 // pred_check
        %p81 = pneg %p80
      $region14: #{tpu_custom_call.1} parent=5 // pred_check_branch
        %83 = sbr.rel (%p81) target = $region16
      $region15: #{tpu_custom_call.1} parent=5 // pred_region
        // Predicated region
        $region17: #{tpu_custom_call.1} parent=15 // pred_check
          %p84 = pneg %p33
        $region18: #{tpu_custom_call.1} parent=15 // pred_check_branch
          %86 = sbr.rel (%p84) target = $region20
        $region19: #{tpu_custom_call.1} parent=15 // pred_region
          %s87 = sand.u32 %s23, 1
          %s88 = scalar_lea.sflag [#allocation3], %s87
          %s89 = sand.u32 %s23, 1
          %s90 = smul.addr %s89, 48
          %s91 = scalar_lea.vmem [#allocation2], %s90
          %s92 = smul.u32 6, %s13
          %s94 = ssub.s32 768, 768
          %95 = vsyncadd %s88, %s94
          %s96 = smul.addr %s92, 128
          %s97 = scalar_lea.hbm %s0, %s96
          %s98 = sshll.u32 %s91, 4
          %s99 = int_to_ptr.vmem [resolvable:$true] %s98
          %104 = dma.hbm_to_vmem [thread:$0]  %s97, 768, %s99, %s88, 128, 128, 8
        $region20: #{tpu_custom_call.1} parent=15 // pred_fallthru
          _
      $region16: #{tpu_custom_call.1} parent=5 // pred_fallthru
        _
      %p105 = scmp.le.s32.totalorder 1, %s13
      %p106 = scmp.lt.s32.totalorder %s13, 9
      %p107 = pnand %p105, %p106
      %p108 = pneg %p107
      // Predicated region
      $region21: #{tpu_custom_call.1} parent=5 // pred_check
        _
      $region22: #{tpu_custom_call.1} parent=5 // pred_check_branch
        %110 = sbr.rel (%p107) target = $region24
      $region23: #{tpu_custom_call.1} parent=5 // pred_region
        %s111 = ssub.s32 %s13, 1
        %s112 = sand.u32 %s26, 1
        %s113 = scalar_lea.sflag [#allocation3], %s112
        %s114 = sand.u32 %s26, 1
        %s115 = smul.addr %s114, 48
        %s116 = scalar_lea.vmem [#allocation2], %s115
        // Predicated region
        $region25: #{tpu_custom_call.1} parent=23 // pred_check
          %p117 = pneg %p39
        $region26: #{tpu_custom_call.1} parent=23 // pred_check_branch
          %119 = sbr.rel (%p117) target = $region28
        $region27: #{tpu_custom_call.1} parent=23 // pred_region
          %120 = dma.done %s113, 768
        $region28: #{tpu_custom_call.1} parent=23 // pred_fallthru
          _
        %s121 = sand.u32 %s26, 1
        %s122 = scalar_lea.sflag [#allocation3], %s121
        %s123 = sand.u32 %s26, 1
        %s124 = smul.addr %s123, 48
        %s125 = scalar_lea.vmem [#allocation2], %s124
        %p126 = pneg %p39
        %p127 = pneg %p36
        %p128 = pneg %p65
        %p129 = pneg %p62
        %s130 = sand.u32 %s52, 1
        %s131 = scalar_lea.sflag [#allocation4], %s130
        %s132 = sand.u32 %s52, 1
        %s133 = smul.addr %s132, 48
        %s134 = scalar_lea.vmem [#allocation5], %s133
        %s135 = smul.u32 6, %s18
        %s136 = smul.u32 6, %s18
        %v137 = vld [vmem:[%s116] sm:$0xff]
        %v138 = vld [vmem:[%s116 + $0x8] sm:$0xff]
        %v139 = vld [vmem:[%s116 + $0x10] sm:$0xff]
        %v140 = vld [vmem:[%s116 + $0x18] sm:$0xff]
        %v141 = vld [vmem:[%s116 + $0x20] sm:$0xff]
        %v142 = vld [vmem:[%s116 + $0x28] sm:$0xff]
        %143 = vst [vmem:[%s134] sm:$0xff] %v137
        %144 = vst [vmem:[%s134 + $0x8] sm:$0xff] %v138
        %145 = vst [vmem:[%s134 + $0x10] sm:$0xff] %v139
        %146 = vst [vmem:[%s134 + $0x18] sm:$0xff] %v140
        %147 = vst [vmem:[%s134 + $0x20] sm:$0xff] %v141
        %148 = vst [vmem:[%s134 + $0x28] sm:$0xff] %v142
        %s149 = sand.u32 %s52, 1
        %s150 = scalar_lea.sflag [#allocation4], %s149
        %s151 = sand.u32 %s52, 1
        %s152 = smul.addr %s151, 48
        %s153 = scalar_lea.vmem [#allocation5], %s152
        // Predicated region
        $region29: #{tpu_custom_call.1} parent=23 // pred_check
          %p154 = pneg %p62
        $region30: #{tpu_custom_call.1} parent=23 // pred_check_branch
          %156 = sbr.rel (%p154) target = $region32
        $region31: #{tpu_custom_call.1} parent=23 // pred_region
          %s157 = smul.u32 6, %s18
          %s159 = ssub.s32 768, 768
          %160 = vsyncadd %s150, %s159
          %s161 = smul.addr %s157, 128
          %s162 = scalar_lea.hbm %s1, %s161
          %s163 = sshll.u32 %s153, 4
          %s164 = int_to_ptr.vmem [resolvable:$true] %s163
          %169 = dma.vmem_to_hbm [thread:$0]  %s164, 768, %s162, %s150, 128, 128, 8
        $region32: #{tpu_custom_call.1} parent=23 // pred_fallthru
          _
      $region24: #{tpu_custom_call.1} parent=5 // pred_fallthru
        _
      %p170 = scmp.le.s32.totalorder 2, %s13
      // Predicated region
      $region33: #{tpu_custom_call.1} parent=5 // pred_check
        %p171 = pneg %p170
      $region34: #{tpu_custom_call.1} parent=5 // pred_check_branch
        %173 = sbr.rel (%p171) target = $region36
      $region35: #{tpu_custom_call.1} parent=5 // pred_region
        %s174 = ssub.s32 %s13, 2
        // Predicated region
        $region37: #{tpu_custom_call.1} parent=35 // pred_check
          %p175 = pneg %p68
        $region38: #{tpu_custom_call.1} parent=35 // pred_check_branch
          %177 = sbr.rel (%p175) target = $region40
        $region39: #{tpu_custom_call.1} parent=35 // pred_region
          %s178 = sand.u32 %s53, 1
          %s179 = scalar_lea.sflag [#allocation4], %s178
          %s180 = sand.u32 %s53, 1
          %s181 = smul.addr %s180, 48
          %s182 = scalar_lea.vmem [#allocation5], %s181
          %183 = dma.done %s179, 768
        $region40: #{tpu_custom_call.1} parent=35 // pred_fallthru
          _
      $region36: #{tpu_custom_call.1} parent=5 // pred_fallthru
        _
    $region6: #{tpu_custom_call.1} parent=1 // loop_footer
      %s17 = sadd.s32 1, %s13
    $region7: #{tpu_custom_call.1} parent=1 // loop_footer_branch
      %12 = sbr.rel target = $region3
    $region8: #{tpu_custom_call.1} parent=1 // loop_exit
      _
    %184 = vsyncpa [#allocation3], 1
    %s185 = scalar_lea.sflag [#allocation3], 1
    %186 = vsyncpa %s185, 1
    %187 = vsyncpa [#allocation4], 1
    %s188 = scalar_lea.sflag [#allocation4], 1
    %189 = vsyncpa %s188, 1

</llo_original>
